<compile_context>
chip_gen: v6e
topology: v6e:2x2x1
jax: 0.10.0
libtpu: 0.0.40
codegen_flags: <defaults>
</compile_context>

<pallas_src>
import functools

import jax
import jax.numpy as jnp
from jax import lax
from jax.experimental import pallas as pl
from jax.experimental.pallas import tpu as pltpu


# ----------------------------------------------------------------------------
# small helpers
# ----------------------------------------------------------------------------
def _silu(x):
    # x * sigmoid(x); exp -> EUP, approximate reciprocal -> EUP.
    return x * pl.reciprocal(1.0 + jnp.exp(-x), approx=True)


def _lane_shift(v, off, size, sign):
    """out[..., i] = v[..., i + off] (circular).  Wrapped lanes are always
    masked by the caller, so the wrap direction never leaks into the output."""
    if off == 0:
        return v
    return pltpu.roll(v, shift=(sign * (-off)) % size, axis=1)


def _fold_bn(w, gamma, beta, mean, var, eps=1e-5):
    """Fold eval-mode BatchNorm into a bias-free conv (out-channels on axis 0)."""
    scale = gamma / jnp.sqrt(var + eps)
    w_f = w * scale.reshape((-1,) + (1,) * (w.ndim - 1))
    b_f = beta - mean * scale
    return w_f, b_f


def _pick_strip(H, W, cap):
    """Largest strip height TH <= cap with H % TH == 0 and TH*W % 128 == 0
    (lane-dense output blocks); fall back to a single full-height strip."""
    for th in range(min(cap, H), 0, -1):
        if H % th == 0 and (th * W) % 128 == 0:
            return th
    return H


def _pick_tile(n, cap):
    """Largest multiple of 128 that divides n and is <= cap; else full n."""
    t = min(cap, n) - (min(cap, n) % 128)
    while t >= 128:
        if n % t == 0:
            return t
        t -= 128
    return n


# ----------------------------------------------------------------------------
# runtime probe for pltpu.roll's shift convention (expected: np.roll semantics,
# positive shift moves data toward higher lane indices).  Probing once makes
# the static tap-shift sign robust across toolchain versions.  Must be called
# OUTSIDE any jit trace (it reads a concrete value back to the host).
# ----------------------------------------------------------------------------
def _roll_probe_kernel(x_ref, o_ref):
    o_ref[...] = pltpu.roll(x_ref[...], shift=1, axis=1)


def _detect_roll_sign():
    x = jnp.tile(jnp.arange(256, dtype=jnp.float32)[None, :], (8, 1))
    y = pl.pallas_call(
        _roll_probe_kernel,
        out_shape=jax.ShapeDtypeStruct((8, 256), jnp.float32))(x)
    return 1 if float(y[0, 0]) == 255.0 else -1


# ----------------------------------------------------------------------------
# pointwise 1x1 Conv + BN + SiLU kernel  (MSBlock.in_conv / MSBlock.out_conv)
# ----------------------------------------------------------------------------
def pointwise_conv_kernel(x_ref, w_ref, b_ref, o_ref):
    x = x_ref[0]                                             # (Cin, T) f32
    y = jnp.dot(w_ref[...], x.astype(jnp.bfloat16),          # bf16 MXU operands
                preferred_element_type=jnp.float32)          # f32 accumulate
    o_ref[0] = _silu(y + b_ref[...]).astype(o_ref.dtype)


def conv1x1_bn_silu_pallas(x_nchw, w_oihw, bn, *, tile_cap=2048):
    N, Cin, H, W = x_nchw.shape
    HW = H * W
    wf, bf = _fold_bn(w_oihw[:, :, 0, 0], *bn)               # (Cout, Cin)
    Cout = wf.shape[0]
    T = _pick_tile(HW, tile_cap)
    S = HW // T
    x_flat = x_nchw.reshape(N, Cin, HW)                      # pure reshape, no transpose

    out = pl.pallas_call(
        pointwise_conv_kernel,
        out_shape=jax.ShapeDtypeStruct((N, Cout, HW), x_nchw.dtype),
        grid_spec=pltpu.PrefetchScalarGridSpec(
            num_scalar_prefetch=0,
            grid=(N, S),
            in_specs=[
                pl.BlockSpec((1, Cin, T), lambda n, s: (n, 0, s)),
                pl.BlockSpec((Cout, Cin), lambda n, s: (0, 0)),
                pl.BlockSpec((Cout, 1), lambda n, s: (0, 0)),
            ],
            out_specs=pl.BlockSpec((1, Cout, T), lambda n, s: (n, 0, s)),
        ),
        compiler_params=pltpu.CompilerParams(
            dimension_semantics=("parallel", "parallel"),
            vmem_limit_bytes=48 * 1024 * 1024),
    )(x_flat, wf.astype(jnp.bfloat16), bf.reshape(Cout, 1))
    return out.reshape(N, Cout, H, W)


# ----------------------------------------------------------------------------
# fused MSBlockLayer kernel: 1x1 -> depthwise kxk -> 1x1 (BN folded, SiLU)
# grid = (batch, H-strips with a p-row halo); in-kernel layout (C, strip_len)
# ----------------------------------------------------------------------------
def msblock_layer_kernel(x_ref, w1_ref, b1_ref, wdw_ref, bdw_ref, w3_ref,
                         b3_ref, cmask_ref, o_ref, *, k, W, TH, HW, lh_pad,
                         roll_sign):
    p = k // 2
    THW = TH * W
    s = pl.program_id(1)

    x = x_ref[0, 0]                                          # (Cin, lh_pad) f32

    # ---- in_conv: 1x1 conv == matmul on the MXU (bf16 in, f32 acc) + SiLU ----
    y = jnp.dot(w1_ref[...], x.astype(jnp.bfloat16),
                preferred_element_type=jnp.float32)          # (Couc, lh_pad)
    y = _silu(y + b1_ref[...])

    # Zero halo rows that fall outside the image (only first / last strip).
    gpos = lax.broadcasted_iota(jnp.int32, (1, lh_pad), 1) + (s * THW - p * W)
    y = y * ((gpos >= 0) & (gpos < HW)).astype(jnp.float32)

    # ---- mid_conv: depthwise kxk, 'same' padding, factored roll + mask -------
    cm = cmask_ref[...]                                      # (k, lh_pad)
    wdw = wdw_ref[...]                                       # (Couc, k*k)
    acc = None
    for dj in range(k):
        # column shift + column-validity mask applied once per dj (XLU + 1 VPU mul)
        t = _lane_shift(y, dj - p, lh_pad, roll_sign) * cm[dj:dj + 1, :]
        for di in range(k):
            tap = wdw[:, di * k + dj:di * k + dj + 1]        # (Couc, 1)
            c = _lane_shift(t, di * W, lh_pad, roll_sign)[:, :THW] * tap
            acc = c if acc is None else acc + c              # f32 FMA stream
    z = _silu(acc + bdw_ref[...])                            # (Couc, THW) f32

    # ---- out_conv: 1x1 conv == matmul on the MXU (bf16 in, f32 acc) + SiLU ---
    out = jnp.dot(w3_ref[...], z.astype(jnp.bfloat16),
                  preferred_element_type=jnp.float32)        # (Cin, THW)
    o_ref[0] = _silu(out + b3_ref[...]).astype(o_ref.dtype)


def msblock_layer_pallas(x_nchw, lp, k, *, roll_sign, strip_rows=8):
    """One MSBlockLayer forward. x_nchw: (N, Cin, H, W) f32 -> (N, Cin, H, W)."""
    N, Cin, H, W = x_nchw.shape
    p = k // 2
    assert k % 2 == 1 and p < W, "depthwise kernel must be odd with k//2 < W"
    HW = H * W

    TH = _pick_strip(H, W, strip_rows)        # strip height (VMEM / pipelining knob)
    S = H // TH
    THW = TH * W
    Lh = (TH + 2 * p) * W                     # haloed strip, flattened
    Lh_pad = -(-Lh // 128) * 128              # multiple of 128 so rolls stay native

    # Fold eval-mode BN into each bias-free conv (hoisted out of the kernel).
    w1, b1 = _fold_bn(lp["w_in"][:, :, 0, 0], *lp["bn_in"])      # (Couc, Cin)
    wdw, bdw = _fold_bn(lp["w_mid"][:, 0], *lp["bn_mid"])        # (Couc, k, k)
    w3, b3 = _fold_bn(lp["w_out"][:, :, 0, 0], *lp["bn_out"])    # (Cin, Couc)
    Couc = w1.shape[0]

    # Haloed H-strips (halo rows duplicated wrapper-side: 2p/TH extra input
    # bytes).  At production sizes replace this with Element-indexed overlapping
    # input blocks or a manual halo DMA to avoid the duplication.
    xp = jnp.pad(x_nchw, ((0, 0), (0, 0), (p, p), (0, 0)))
    strips = jnp.stack(
        [xp[:, :, s * TH:s * TH + TH + 2 * p, :] for s in range(S)], axis=1)
    strips = strips.reshape(N, S, Cin, Lh)
    if Lh_pad > Lh:
        strips = jnp.pad(strips, ((0, 0), (0, 0), (0, 0), (0, Lh_pad - Lh)))

    # Per-dj column-validity masks over the flattened strip axis (hoisted).
    col = jnp.arange(Lh_pad, dtype=jnp.int32) % W
    cmask = jnp.stack(
        [((col + (dj - p)) >= 0) & ((col + (dj - p)) < W) for dj in range(k)]
    ).astype(jnp.float32)                                        # (k, Lh_pad)

    kernel = functools.partial(msblock_layer_kernel, k=k, W=W, TH=TH, HW=HW,
                               lh_pad=Lh_pad, roll_sign=roll_sign)

    out_flat = pl.pallas_call(
        kernel,
        out_shape=jax.ShapeDtypeStruct((N, Cin, HW), x_nchw.dtype),
        grid_spec=pltpu.PrefetchScalarGridSpec(
            num_scalar_prefetch=0,
            grid=(N, S),
            in_specs=[
                pl.BlockSpec((1, 1, Cin, Lh_pad), lambda n, s: (n, s, 0, 0)),  # x strips
                pl.BlockSpec((Couc, Cin), lambda n, s: (0, 0)),                # w1 (bf16)
                pl.BlockSpec((Couc, 1), lambda n, s: (0, 0)),                  # b1
                pl.BlockSpec((Couc, k * k), lambda n, s: (0, 0)),              # wdw
                pl.BlockSpec((Couc, 1), lambda n, s: (0, 0)),                  # bdw
                pl.BlockSpec((Cin, Couc), lambda n, s: (0, 0)),                # w3 (bf16)
                pl.BlockSpec((Cin, 1), lambda n, s: (0, 0)),                   # b3
                pl.BlockSpec((k, Lh_pad), lambda n, s: (0, 0)),                # col masks
            ],
            out_specs=pl.BlockSpec((1, Cin, THW), lambda n, s: (n, 0, s)),
        ),
        compiler_params=pltpu.CompilerParams(
            dimension_semantics=("parallel", "parallel"),   # batch x strip, both independent
            vmem_limit_bytes=48 * 1024 * 1024),
    )(strips,
      w1.astype(jnp.bfloat16), b1.reshape(Couc, 1),
      wdw.reshape(Couc, k * k), bdw.reshape(Couc, 1),
      w3.astype(jnp.bfloat16), b3.reshape(Cin, 1),
      cmask)
    return out_flat.reshape(N, Cin, H, W)


# ----------------------------------------------------------------------------
# full MSBlock forward (Pallas kernels + XLA glue for split / add / concat)
# ----------------------------------------------------------------------------
def msblock_forward_pallas(x, params, *, kernel_sizes, mid_channel, roll_sign):
    out = conv1x1_bn_silu_pallas(x, params["in_conv"]["w"], params["in_conv"]["bn"])
    channels = []
    for i, ks in enumerate(kernel_sizes):
        ch = out[:, i * mid_channel:(i + 1) * mid_channel]
        if i >= 1:
            ch = ch + channels[i - 1]                # residual chaining (XLA add)
        if ks != 1:
            for lp in params["branches"][i]:
                ch = msblock_layer_pallas(ch, lp, ks, roll_sign=roll_sign)
        channels.append(ch)                          # Identity branch passes through
    out = jnp.concatenate(channels, axis=1)          # XLA concat
    return conv1x1_bn_silu_pallas(out, params["out_conv"]["w"],
                                  params["out_conv"]["bn"])


# ----------------------------------------------------------------------------
# pure-JAX reference (lax.conv, f32, eval-mode BN) mirroring the torch module
# ----------------------------------------------------------------------------
def _conv_bn_silu_ref(x, w, bn, groups=1, pad=0):
    gamma, beta, mean, var = bn
    y = lax.conv_general_dilated(
        x, w, window_strides=(1, 1), padding=[(pad, pad), (pad, pad)],
        dimension_numbers=("NCHW", "OIHW", "NCHW"), feature_group_count=groups)
    scale = gamma / jnp.sqrt(var + 1e-5)
    bias = beta - mean * scale
    y = y * scale[None, :, None, None] + bias[None, :, None, None]
    return y * jax.nn.sigmoid(y)


def msblock_forward_ref(x, params, kernel_sizes, mid_channel):
    out = _conv_bn_silu_ref(x, params["in_conv"]["w"], params["in_conv"]["bn"])
    channels = []
    for i, ks in enumerate(kernel_sizes):
        ch = out[:, i * mid_channel:(i + 1) * mid_channel]
        if i >= 1:
            ch = ch + channels[i - 1]
        if ks != 1:
            for lp in params["branches"][i]:
                ouc = lp["w_mid"].shape[0]
                ch = _conv_bn_silu_ref(ch, lp["w_in"], lp["bn_in"])
                ch = _conv_bn_silu_ref(ch, lp["w_mid"], lp["bn_mid"],
                                       groups=ouc, pad=ks // 2)
                ch = _conv_bn_silu_ref(ch, lp["w_out"], lp["bn_out"])
        channels.append(ch)
    out = jnp.concatenate(channels, axis=1)
    return _conv_bn_silu_ref(out, params["out_conv"]["w"], params["out_conv"]["bn"])


# ----------------------------------------------------------------------------
# deterministic parameter init (mirrors the torch module's constructor math)
# ----------------------------------------------------------------------------
def _bn_init(key, c):
    k0, k1, k2, k3 = jax.random.split(key, 4)
    return (jax.random.uniform(k0, (c,), jnp.float32, 0.5, 1.5),
            0.1 * jax.random.normal(k1, (c,), jnp.float32),
            0.1 * jax.random.normal(k2, (c,), jnp.float32),
            jax.random.uniform(k3, (c,), jnp.float32, 0.5, 1.5))


def _conv_init(key, cin, cout):
    kw, kb = jax.random.split(key)
    return {"w": 0.2 * jax.random.normal(kw, (cout, cin, 1, 1), jnp.float32),
            "bn": _bn_init(kb, cout)}


def _layer_init(key, inc, ouc, k):
    k1, k2, k3, k4, k5, k6 = jax.random.split(key, 6)
    return {"w_in": 0.2 * jax.random.normal(k1, (ouc, inc, 1, 1), jnp.float32),
            "bn_in": _bn_init(k2, ouc),
            "w_mid": 0.25 * jax.random.normal(k3, (ouc, 1, k, k), jnp.float32),
            "bn_mid": _bn_init(k4, ouc),
            "w_out": 0.2 * jax.random.normal(k5, (inc, ouc, 1, 1), jnp.float32),
            "bn_out": _bn_init(k6, inc)}


def init_msblock_params(key, inc, ouc, kernel_sizes, in_expand_ratio=3.0,
                        mid_expand_ratio=2.0, layers_num=2, in_down_ratio=2.0):
    in_channel = int(inc * in_expand_ratio // in_down_ratio)
    mid_channel = in_channel // len(kernel_sizes)
    groups = int(mid_channel * mid_expand_ratio)
    keys = jax.random.split(key, 2 + len(kernel_sizes))
    branches = []
    for i, ks in enumerate(kernel_sizes):
        if ks == 1:
            branches.append([])                      # nn.Identity branch
        else:
            lk = jax.random.split(keys[2 + i], layers_num)
            branches.append([_layer_init(lk[j], mid_channel, groups, ks)
                             for j in range(layers_num)])
    params = {"in_conv": _conv_init(keys[0], inc, in_channel),
              "out_conv": _conv_init(keys[1], in_channel, ouc),
              "branches": branches}
    return params, mid_channel


# ----------------------------------------------------------------------------
if __name__ == "__main__":
    key = jax.random.PRNGKey(0)
    kx, kp = jax.random.split(key)

    # MSBlock(inc=8, ouc=8, kernel_sizes=(1,3,3), layers_num=2):
    #   in_channel=12, mid_channel=4, groups=8
    N, inc, H, W = 2, 8, 16, 16
    ouc = 8
    kernel_sizes = (1, 3, 3)
    layers_num = 2

    x = jax.random.normal(kx, (N, inc, H, W), jnp.float32)
    params, mid_channel = init_msblock_params(kp, inc, ouc, kernel_sizes,
                                              layers_num=layers_num)

    # one-time probe (outside jit) so the depthwise tap-shift sign is correct
    roll_sign = _detect_roll_sign()

    fwd = jax.jit(functools.partial(msblock_forward_pallas,
                                    kernel_sizes=kernel_sizes,
                                    mid_channel=mid_channel,
                                    roll_sign=roll_sign))
    out = jax.block_until_ready(fwd(x, params))

    ref = jax.block_until_ready(
        msblock_forward_ref(x, params, kernel_sizes, mid_channel))

    assert out.shape == (N, ouc, H, W)
    max_err = float(jnp.max(jnp.abs(out - ref)))
    # bf16 MXU operands + approx-reciprocal SiLU -> relaxed tolerance vs f32 ref
    assert jnp.allclose(out, ref, atol=5e-2, rtol=5e-2), f"max abs err {max_err}"
    print("KERNEL_OK")
</pallas_src>

<mosaic_0001>
module attributes {stable_mosaic.version = 11 : i64} {
  func.func @_roll_probe_kernel(%arg0: memref<8x256xf32, #tpu.memory_space<vmem>>, %arg1: memref<8x256xf32, #tpu.memory_space<vmem>>) attributes {dimension_semantics = [], scalar_prefetch = 0 : i64, scratch_operands = 0 : i64, tpu.core_type = #tpu.core_type<tc>} {
    %c0 = arith.constant 0 : index
    %c0_0 = arith.constant 0 : index
    %0 = vector.load %arg0[%c0, %c0_0] : memref<8x256xf32, #tpu.memory_space<vmem>>, vector<8x256xf32>
    %c1_i32 = arith.constant 1 : i32
    %1 = tpu.dynamic_rotate %0 by %c1_i32 dim 1 : vector<8x256xf32>, i32 -> vector<8x256xf32>
    %c0_1 = arith.constant 0 : index
    %c0_2 = arith.constant 0 : index
    %2 = vector.load %arg1[%c0_1, %c0_2] : memref<8x256xf32, #tpu.memory_space<vmem>>, vector<8x256xf32>
    tpu.vector_store %arg1[%c0_1, %c0_2], %1 {strides = array<i32>} : memref<8x256xf32, #tpu.memory_space<vmem>>, vector<8x256xf32>,
    return
  }
}

</mosaic_0001>

<llo_original>
// kernel: tpu_custom_call.1
$region0: #{tpu_custom_call.1}
  #allocation0 [shape = 'u32[]', space=smem, size = 0x4, offset = 0x4, fixed_abs, tag = 'smem constant byte address 0x4 - core index']
  #allocation1 [shape = 'u32[144,128]{1,0:T(1,128)}', space=vmem, size = 0x12000, scoped, tag = 'internal scratch']
  %s0 = inlined_call_operand.hbm [shape: f32[8,256], index: 0, kind: input, shape index: {}]
  %s1 = inlined_call_operand.hbm [shape: f32[8,256], index: 1, kind: output, shape index: {}]
  %s2 = sld [smem:[#allocation0]]
  $region18: #{tpu_custom_call.1} parent=0
    _
  %s4 = ssub.s32 1, %s2
  %s5 = scalar_select 0, %s4, %s2
  $region1: #{tpu_custom_call.1} parent=0
    #allocation2 [shape = 'u8[8192]{0}', space=vmem, size = 0x2000, scoped, tag = 'input window, operand 0, single buffered']
    #allocation3 [shape = 's32[1]{0}', space=sflag, size = 0x4, scoped, tag = 'scoped memory for tpu_custom_call.1']
    #allocation4 [shape = 's32[1]{0}', space=sflag, size = 0x4, scoped, tag = 'scoped memory for tpu_custom_call.1']
    #allocation5 [shape = 'u8[8192]{0}', space=vmem, size = 0x2000, scoped, tag = 'output window, operand 0, single buffered']
    %6 = vsyncpa [#allocation3], 0
    %7 = vsyncpa [#allocation4], 0
    // Predicated region
    $region2: #{tpu_custom_call.1} parent=1 // pred_check
      _
    $region3: #{tpu_custom_call.1} parent=1 // pred_check_branch
      %9 = sbr.rel (0) target = $region5
    $region4: #{tpu_custom_call.1} parent=1 // pred_region
      %s11 = ssub.s32 256, 256
      %12 = vsyncadd [#allocation3], %s11
      %s14 = sshll.u32 [#allocation2], 4
      %s15 = int_to_ptr.vmem [resolvable:$true] %s14
      %17 = dma.hbm_to_vmem [thread:$0]  %s0, 256, %s15, [#allocation3]
    $region5: #{tpu_custom_call.1} parent=1 // pred_fallthru
      _
    // Predicated region
    $region6: #{tpu_custom_call.1} parent=1 // pred_check
      _
    $region7: #{tpu_custom_call.1} parent=1 // pred_check_branch
      %19 = sbr.rel (0) target = $region9
    $region8: #{tpu_custom_call.1} parent=1 // pred_region
      %20 = dma.done [#allocation3], 256
    $region9: #{tpu_custom_call.1} parent=1 // pred_fallthru
      _
    %v21 = vld [vmem:[#allocation2] sm:$0xff]
    %v22 = vld [vmem:[#allocation2 + $0x8] sm:$0xff]
    %23 = vrot.lane.b32.xlu0 %v21, 1
    %v24 = vpop.permute.xlu0 %23
    %25 = vrot.lane.b32.xlu0 %v22, 1
    %v26 = vpop.permute.xlu0 %25
    %v27 = vlaneseq
    %v28 = vand.u32 %v27, 127
    %vm29 = vcmp.lt.s32.totalorder %v28, 1
    %v30 = vsel %vm29, %v24, %v26
    %v31 = vsel %vm29, %v26, %v24
    %32 = vst [vmem:[#allocation5] sm:$0xff] %v31
    %33 = vst [vmem:[#allocation5 + $0x8] sm:$0xff] %v30
    // Predicated region
    $region10: #{tpu_custom_call.1} parent=1 // pred_check
      _
    $region11: #{tpu_custom_call.1} parent=1 // pred_check_branch
      %35 = sbr.rel (0) target = $region13
    $region12: #{tpu_custom_call.1} parent=1 // pred_region
      %s37 = ssub.s32 256, 256
      %38 = vsyncadd [#allocation4], %s37
      %s40 = sshll.u32 [#allocation5], 4
      %s41 = int_to_ptr.vmem [resolvable:$true] %s40
      %43 = dma.vmem_to_hbm [thread:$0]  %s41, 256, %s1, [#allocation4]
    $region13: #{tpu_custom_call.1} parent=1 // pred_fallthru
      _
    // Predicated region
    $region14: #{tpu_custom_call.1} parent=1 // pred_check
      _
    $region15: #{tpu_custom_call.1} parent=1 // pred_check_branch
      %45 = sbr.rel (0) target = $region17
    $region16: #{tpu_custom_call.1} parent=1 // pred_region
      %46 = dma.done [#allocation4], 256
    $region17: #{tpu_custom_call.1} parent=1 // pred_fallthru
      _
    %47 = vsyncpa [#allocation3], 1
    %48 = vsyncpa [#allocation4], 1

</llo_original>
